<compile_context>
chip_gen: v6e
topology: v6e:2x2x1
jax: 0.10.0
libtpu: 0.0.40
codegen_flags: <defaults>
</compile_context>

<pallas_src>
import functools

import jax
import jax.numpy as jnp
from jax.experimental import pallas as pl
from jax.experimental.pallas import tpu as pltpu

EPS = 1e-5  # nn.LayerNorm default eps


def _layer_norm_cols(x, gamma, beta):
    """LayerNorm over the SUBLANE (feature) axis of a (features, rows) tile.

    Mean-subtracted two-pass form, matching nn.LayerNorm numerics."""
    d = x.shape[0]
    mu = jnp.sum(x, axis=0, keepdims=True) * (1.0 / d)
    xc = x - mu
    var = jnp.sum(xc * xc, axis=0, keepdims=True) * (1.0 / d)
    return xc * jax.lax.rsqrt(var + EPS) * gamma + beta


def subgraph_layer_kernel(
    x_ref,    # (L, Rb)       matmul_dtype; rows on the lane axis
    w1_ref,   # (hidden, L)   matmul_dtype (PyTorch layout: out x in)
    ln1_ref,  # (hidden, 3)   f32 columns: [bias1, gamma1, beta1]
    w2_ref,   # (L, hidden)   matmul_dtype
    ln2_ref,  # (L, 3)        f32 columns: [bias2, gamma2, beta2]
    o_ref,    # (L, Rb)       f32 output, lane-dense
    *,
    matmul_dtype,
):
    ln1 = ln1_ref[...]
    ln2 = ln2_ref[...]

    # --- linear1 -> LayerNorm -> ReLU (rows fill the MXU result width) ---
    h = jnp.dot(w1_ref[...], x_ref[...], preferred_element_type=jnp.float32)
    h = h + ln1[:, 0:1]
    h = _layer_norm_cols(h, ln1[:, 1:2], ln1[:, 2:3])
    h = jnp.maximum(h, 0.0)
    if matmul_dtype != jnp.float32:
        h = h.astype(matmul_dtype)

    # --- linear2 -> LayerNorm -> ReLU ---
    o = jnp.dot(w2_ref[...], h, preferred_element_type=jnp.float32)
    o = o + ln2[:, 0:1]
    o = _layer_norm_cols(o, ln2[:, 1:2], ln2[:, 2:3])
    o_ref[...] = jnp.maximum(o, 0.0)


@functools.partial(
    jax.jit, static_argnames=("matmul_dtype", "row_block", "min_steps")
)
def subgraph_layer(x, params, *, matmul_dtype=jnp.float32, row_block=512,
                   min_steps=2):
    """x: [B, n, L] float32 -> [B, n, 2*L] float32 (SubGraphLayer forward)."""
    B, n, L = x.shape
    w1, b1, g1, be1, w2, b2, g2, be2 = params   # w1: (L, hidden), w2: (hidden, L)
    hidden = w1.shape[1]

    total = B * n
    # Lane-axis row block: multiple of 128 close to row_block; if that would
    # collapse the grid to fewer than `min_steps` steps and there is enough
    # work, shrink so both v7x TensorCores get row blocks.
    rb = max(128, (min(row_block, max(total, 1)) // 128) * 128)
    if pl.cdiv(total, rb) < min_steps and total >= min_steps * 128:
        rb = max(128, pl.cdiv(pl.cdiv(total, min_steps), 128) * 128)
    steps = pl.cdiv(total, rb)
    r_pad = steps * rb

    # Rows -> lane axis: (B, n, L) -> (L, r_pad), zero-padded to a full grid.
    x2 = x.reshape(total, L)
    if r_pad != total:
        x2 = jnp.pad(x2, ((0, r_pad - total), (0, 0)))
    x_t = x2.T                      # (L, r_pad)
    w1_t = w1.T                     # (hidden, L)  PyTorch layout
    w2_t = w2.T                     # (L, hidden)
    if matmul_dtype != jnp.float32:
        # One-time casts in the wrapper (not per grid step on the VPU).
        x_t = x_t.astype(matmul_dtype)
        w1_t = w1_t.astype(matmul_dtype)
        w2_t = w2_t.astype(matmul_dtype)

    # Per-feature parameters as column slabs (broadcast along the lane axis);
    # LayerNorm / ReLU stay in f32 on every chip (v5e has no bf16 VPU/EUP).
    ln1 = jnp.stack([b1, g1, be1], axis=1)   # (hidden, 3) f32
    ln2 = jnp.stack([b2, g2, be2], axis=1)   # (L, 3) f32

    kernel = functools.partial(subgraph_layer_kernel, matmul_dtype=matmul_dtype)

    o_t = pl.pallas_call(
        kernel,
        out_shape=jax.ShapeDtypeStruct((L, r_pad), jnp.float32),
        grid_spec=pltpu.PrefetchScalarGridSpec(
            num_scalar_prefetch=0,
            grid=(steps,),
            in_specs=[
                pl.BlockSpec((L, rb), lambda r: (0, r)),        # x_T (lane blocks)
                pl.BlockSpec((hidden, L), lambda r: (0, 0)),    # W1 (grid-invariant)
                pl.BlockSpec((hidden, 3), lambda r: (0, 0)),    # b1/gamma1/beta1
                pl.BlockSpec((L, hidden), lambda r: (0, 0)),    # W2
                pl.BlockSpec((L, 3), lambda r: (0, 0)),         # b2/gamma2/beta2
            ],
            out_specs=pl.BlockSpec((L, rb), lambda r: (0, r)),  # o_T, lane-dense
        ),
        compiler_params=pltpu.CompilerParams(
            # Row blocks are fully independent -> megacore-shardable on v7x.
            dimension_semantics=("parallel",),
        ),
    )(x_t, w1_t, ln1, w2_t, ln2)

    # Tiny epilogue left to XLA (fuses / negligible): drop padding, restore
    # (B, n, L), max over n, broadcast and lane-axis concat.
    o = o_t[:, :total].T.reshape(B, n, L)
    m = jnp.max(o, axis=1, keepdims=True)
    return jnp.concatenate([jnp.broadcast_to(m, (B, n, L)), o], axis=-1)


def init_params(key, L, hidden=32):
    """Deterministic init matching MLP.__init__ (xavier_uniform weights,
    bias = 0.01, LayerNorm gamma=1 / beta=0)."""
    k1, k2 = jax.random.split(key)

    def xavier(k, fan_in, fan_out):
        bound = (6.0 / (fan_in + fan_out)) ** 0.5
        # stored as (in, out) so the reference does x @ W directly
        return jax.random.uniform(
            k, (fan_in, fan_out), jnp.float32, minval=-bound, maxval=bound
        )

    w1 = xavier(k1, L, hidden)
    b1 = jnp.full((hidden,), 0.01, jnp.float32)
    g1 = jnp.ones((hidden,), jnp.float32)
    be1 = jnp.zeros((hidden,), jnp.float32)
    w2 = xavier(k2, hidden, L)
    b2 = jnp.full((L,), 0.01, jnp.float32)
    g2 = jnp.ones((L,), jnp.float32)
    be2 = jnp.zeros((L,), jnp.float32)
    return (w1, b1, g1, be1, w2, b2, g2, be2)


def _layer_norm_ref(x, gamma, beta):
    mu = jnp.mean(x, axis=-1, keepdims=True)
    var = jnp.mean((x - mu) ** 2, axis=-1, keepdims=True)
    return (x - mu) * jax.lax.rsqrt(var + EPS) * gamma + beta


def reference(x, params):
    """Pure-JAX reference of the PyTorch forward, for a correctness check."""
    w1, b1, g1, be1, w2, b2, g2, be2 = params
    h = x @ w1 + b1
    h = _layer_norm_ref(h, g1, be1)
    h = jnp.maximum(h, 0.0)
    o = h @ w2 + b2
    o = _layer_norm_ref(o, g2, be2)
    o = jnp.maximum(o, 0.0)
    m = jnp.max(o, axis=1, keepdims=True)               # max over n
    m_b = jnp.broadcast_to(m, o.shape)
    return jnp.concatenate([m_b, o], axis=-1)


if __name__ == "__main__":
    key = jax.random.PRNGKey(0)
    kx, kp = jax.random.split(key)

    # x.shape = [batch_size, n, len]; hidden = 32 as in the PyTorch module.
    B, n, L = 64, 8, 4
    x = jax.random.normal(kx, (B, n, L), jnp.float32)
    params = init_params(kp, L, hidden=32)
    y_ref = reference(x, params)

    # f32 path (exact module semantics); 512 rows -> 2 lane blocks of 256.
    y = jax.block_until_ready(subgraph_layer(x, params))
    assert y.shape == (B, n, 2 * L), y.shape
    assert jnp.allclose(y, y_ref, atol=1e-4, rtol=1e-4), float(
        jnp.max(jnp.abs(y - y_ref))
    )

    # Smaller row block -> 4 grid steps of 128 lanes (v7x megacore-friendly).
    y4 = jax.block_until_ready(subgraph_layer(x, params, row_block=128))
    assert jnp.allclose(y4, y_ref, atol=1e-4, rtol=1e-4), float(
        jnp.max(jnp.abs(y4 - y_ref))
    )

    # Small / ragged batch: 40 rows padded up to one 128-lane block.
    x_small = jax.random.normal(jax.random.PRNGKey(1), (5, n, L), jnp.float32)
    y_small = jax.block_until_ready(subgraph_layer(x_small, params))
    assert y_small.shape == (5, n, 2 * L), y_small.shape
    y_small_ref = reference(x_small, params)
    assert jnp.allclose(y_small, y_small_ref, atol=1e-4, rtol=1e-4), float(
        jnp.max(jnp.abs(y_small - y_small_ref))
    )

    # bf16 MXU-operand path (recommended on v6e / v7x); LN/ReLU/max stay f32.
    y_bf16 = jax.block_until_ready(
        subgraph_layer(x, params, matmul_dtype=jnp.bfloat16)
    )
    assert y_bf16.shape == (B, n, 2 * L), y_bf16.shape
    assert jnp.allclose(y_bf16, y_ref, atol=2e-1, rtol=1e-1), float(
        jnp.max(jnp.abs(y_bf16 - y_ref))
    )

    print("KERNEL_OK")
</pallas_src>

<mosaic_0001>
module attributes {stable_mosaic.version = 11 : i64} {
  func.func @subgraph_layer_kernel(%arg0: i32, %arg1: memref<4x256xf32, #tpu.memory_space<vmem>>, %arg2: memref<32x4xf32, #tpu.memory_space<vmem>>, %arg3: memref<32x3xf32, #tpu.memory_space<vmem>>, %arg4: memref<4x32xf32, #tpu.memory_space<vmem>>, %arg5: memref<4x3xf32, #tpu.memory_space<vmem>>, %arg6: memref<4x256xf32, #tpu.memory_space<vmem>>) attributes {dimension_semantics = [#tpu.dimension_semantics<parallel>], iteration_bounds = array<i64: 2>, scalar_prefetch = 0 : i64, scratch_operands = 0 : i64, tpu.core_type = #tpu.core_type<tc>, window_params = [{transform_indices = @transform_0, window_bounds = array<i64: 4, 256>}, {pipeline_mode = #tpu.pipeline_mode<synchronous>, transform_indices = @transform_1, window_bounds = array<i64: 32, 4>}, {pipeline_mode = #tpu.pipeline_mode<synchronous>, transform_indices = @transform_2, window_bounds = array<i64: 32, 3>}, {pipeline_mode = #tpu.pipeline_mode<synchronous>, transform_indices = @transform_3, window_bounds = array<i64: 4, 32>}, {pipeline_mode = #tpu.pipeline_mode<synchronous>, transform_indices = @transform_4, window_bounds = array<i64: 4, 3>}, {transform_indices = @transform_5, window_bounds = array<i64: 4, 256>}]} {
    %c0 = arith.constant 0 : index
    %c0_0 = arith.constant 0 : index
    %0 = vector.load %arg3[%c0, %c0_0] : memref<32x3xf32, #tpu.memory_space<vmem>>, vector<32x3xf32>
    %c0_1 = arith.constant 0 : index
    %c0_2 = arith.constant 0 : index
    %1 = vector.load %arg5[%c0_1, %c0_2] : memref<4x3xf32, #tpu.memory_space<vmem>>, vector<4x3xf32>
    %c0_3 = arith.constant 0 : index
    %c0_4 = arith.constant 0 : index
    %2 = vector.load %arg2[%c0_3, %c0_4] : memref<32x4xf32, #tpu.memory_space<vmem>>, vector<32x4xf32>
    %c0_5 = arith.constant 0 : index
    %c0_6 = arith.constant 0 : index
    %3 = vector.load %arg1[%c0_5, %c0_6] : memref<4x256xf32, #tpu.memory_space<vmem>>, vector<4x256xf32>
    %cst = arith.constant dense<0.000000e+00> : vector<32x256xf32>
    %4 = tpu.matmul %2, %3, %cst {dimension_numbers = #tpu.dot_dimension_numbers<[1], [0], [0], [1], [0, 0, 1, 1], [], []>} : vector<32x4xf32>, vector<4x256xf32>, vector<32x256xf32> -> vector<32x256xf32>
    %5 = vector.extract_strided_slice %0 {offsets = [0, 0], sizes = [32, 1], strides = [1, 1]} : vector<32x3xf32> to vector<32x1xf32>
    %6 = vector.broadcast %5 : vector<32x1xf32> to vector<32x256xf32>
    %7 = arith.addf %4, %6 : vector<32x256xf32>
    %8 = vector.extract_strided_slice %0 {offsets = [0, 1], sizes = [32, 1], strides = [1, 1]} : vector<32x3xf32> to vector<32x1xf32>
    %9 = vector.extract_strided_slice %0 {offsets = [0, 2], sizes = [32, 1], strides = [1, 1]} : vector<32x3xf32> to vector<32x1xf32>
    %cst_7 = arith.constant dense<0.000000e+00> : vector<256xf32>
    %10 = vector.multi_reduction <add>, %7, %cst_7 [0] : vector<32x256xf32> to vector<256xf32>
    %11 = vector.shape_cast %10 : vector<256xf32> to vector<1x256xf32>
    %cst_8 = arith.constant 3.125000e-02 : f32
    %12 = vector.broadcast %cst_8 : f32 to vector<1x256xf32>
    %13 = arith.mulf %11, %12 : vector<1x256xf32>
    %14 = vector.broadcast %13 : vector<1x256xf32> to vector<32x256xf32>
    %15 = arith.subf %7, %14 : vector<32x256xf32>
    %16 = arith.mulf %15, %15 : vector<32x256xf32>
    %cst_9 = arith.constant dense<0.000000e+00> : vector<256xf32>
    %17 = vector.multi_reduction <add>, %16, %cst_9 [0] : vector<32x256xf32> to vector<256xf32>
    %18 = vector.shape_cast %17 : vector<256xf32> to vector<1x256xf32>
    %cst_10 = arith.constant 3.125000e-02 : f32
    %19 = vector.broadcast %cst_10 : f32 to vector<1x256xf32>
    %20 = arith.mulf %18, %19 : vector<1x256xf32>
    %cst_11 = arith.constant 9.99999974E-6 : f32
    %21 = vector.broadcast %cst_11 : f32 to vector<1x256xf32>
    %22 = arith.addf %20, %21 : vector<1x256xf32>
    %23 = math.rsqrt %22 : vector<1x256xf32>
    %24 = vector.broadcast %23 : vector<1x256xf32> to vector<32x256xf32>
    %25 = arith.mulf %15, %24 : vector<32x256xf32>
    %26 = vector.broadcast %8 : vector<32x1xf32> to vector<32x256xf32>
    %27 = arith.mulf %25, %26 : vector<32x256xf32>
    %28 = vector.broadcast %9 : vector<32x1xf32> to vector<32x256xf32>
    %29 = arith.addf %27, %28 : vector<32x256xf32>
    %cst_12 = arith.constant 0.000000e+00 : f32
    %30 = vector.broadcast %cst_12 : f32 to vector<32x256xf32>
    %31 = arith.maximumf %29, %30 : vector<32x256xf32>
    %c0_13 = arith.constant 0 : index
    %c0_14 = arith.constant 0 : index
    %32 = vector.load %arg4[%c0_13, %c0_14] : memref<4x32xf32, #tpu.memory_space<vmem>>, vector<4x32xf32>
    %cst_15 = arith.constant dense<0.000000e+00> : vector<4x256xf32>
    %33 = tpu.matmul %32, %31, %cst_15 {dimension_numbers = #tpu.dot_dimension_numbers<[1], [0], [0], [1], [0, 0, 1, 1], [], []>} : vector<4x32xf32>, vector<32x256xf32>, vector<4x256xf32> -> vector<4x256xf32>
    %34 = vector.extract_strided_slice %1 {offsets = [0, 0], sizes = [4, 1], strides = [1, 1]} : vector<4x3xf32> to vector<4x1xf32>
    %35 = vector.broadcast %34 : vector<4x1xf32> to vector<4x256xf32>
    %36 = arith.addf %33, %35 : vector<4x256xf32>
    %37 = vector.extract_strided_slice %1 {offsets = [0, 1], sizes = [4, 1], strides = [1, 1]} : vector<4x3xf32> to vector<4x1xf32>
    %38 = vector.extract_strided_slice %1 {offsets = [0, 2], sizes = [4, 1], strides = [1, 1]} : vector<4x3xf32> to vector<4x1xf32>
    %cst_16 = arith.constant dense<0.000000e+00> : vector<256xf32>
    %39 = vector.multi_reduction <add>, %36, %cst_16 [0] : vector<4x256xf32> to vector<256xf32>
    %40 = vector.shape_cast %39 : vector<256xf32> to vector<1x256xf32>
    %cst_17 = arith.constant 2.500000e-01 : f32
    %41 = vector.broadcast %cst_17 : f32 to vector<1x256xf32>
    %42 = arith.mulf %40, %41 : vector<1x256xf32>
    %43 = vector.broadcast %42 : vector<1x256xf32> to vector<4x256xf32>
    %44 = arith.subf %36, %43 : vector<4x256xf32>
    %45 = arith.mulf %44, %44 : vector<4x256xf32>
    %cst_18 = arith.constant dense<0.000000e+00> : vector<256xf32>
    %46 = vector.multi_reduction <add>, %45, %cst_18 [0] : vector<4x256xf32> to vector<256xf32>
    %47 = vector.shape_cast %46 : vector<256xf32> to vector<1x256xf32>
    %cst_19 = arith.constant 2.500000e-01 : f32
    %48 = vector.broadcast %cst_19 : f32 to vector<1x256xf32>
    %49 = arith.mulf %47, %48 : vector<1x256xf32>
    %cst_20 = arith.constant 9.99999974E-6 : f32
    %50 = vector.broadcast %cst_20 : f32 to vector<1x256xf32>
    %51 = arith.addf %49, %50 : vector<1x256xf32>
    %52 = math.rsqrt %51 : vector<1x256xf32>
    %53 = vector.broadcast %52 : vector<1x256xf32> to vector<4x256xf32>
    %54 = arith.mulf %44, %53 : vector<4x256xf32>
    %55 = vector.broadcast %37 : vector<4x1xf32> to vector<4x256xf32>
    %56 = arith.mulf %54, %55 : vector<4x256xf32>
    %57 = vector.broadcast %38 : vector<4x1xf32> to vector<4x256xf32>
    %58 = arith.addf %56, %57 : vector<4x256xf32>
    %cst_21 = arith.constant 0.000000e+00 : f32
    %59 = vector.broadcast %cst_21 : f32 to vector<4x256xf32>
    %60 = arith.maximumf %58, %59 : vector<4x256xf32>
    %c0_22 = arith.constant 0 : index
    %c0_23 = arith.constant 0 : index
    %61 = vector.load %arg6[%c0_22, %c0_23] : memref<4x256xf32, #tpu.memory_space<vmem>>, vector<4x256xf32>
    tpu.vector_store %arg6[%c0_22, %c0_23], %60 {strides = array<i32>} : memref<4x256xf32, #tpu.memory_space<vmem>>, vector<4x256xf32>,
    return
  }
  func.func @transform_0(%arg0: i32) -> (i32, i32) {
    %c0_i32 = arith.constant 0 : i32
    %c0_i32_0 = arith.constant 0 : i32
    return %c0_i32, %arg0 : i32, i32
  }
  func.func @transform_1(%arg0: i32) -> (i32, i32) {
    %c0_i32 = arith.constant 0 : i32
    %c0_i32_0 = arith.constant 0 : i32
    %c0_i32_1 = arith.constant 0 : i32
    return %c0_i32, %c0_i32_0 : i32, i32
  }
  func.func @transform_2(%arg0: i32) -> (i32, i32) {
    %c0_i32 = arith.constant 0 : i32
    %c0_i32_0 = arith.constant 0 : i32
    %c0_i32_1 = arith.constant 0 : i32
    return %c0_i32, %c0_i32_0 : i32, i32
  }
  func.func @transform_3(%arg0: i32) -> (i32, i32) {
    %c0_i32 = arith.constant 0 : i32
    %c0_i32_0 = arith.constant 0 : i32
    %c0_i32_1 = arith.constant 0 : i32
    return %c0_i32, %c0_i32_0 : i32, i32
  }
  func.func @transform_4(%arg0: i32) -> (i32, i32) {
    %c0_i32 = arith.constant 0 : i32
    %c0_i32_0 = arith.constant 0 : i32
    %c0_i32_1 = arith.constant 0 : i32
    return %c0_i32, %c0_i32_0 : i32, i32
  }
  func.func @transform_5(%arg0: i32) -> (i32, i32) {
    %c0_i32 = arith.constant 0 : i32
    %c0_i32_0 = arith.constant 0 : i32
    return %c0_i32, %arg0 : i32, i32
  }
}

</mosaic_0001>

<llo_original>
// kernel: subgraph_layer.1
$region0: #{subgraph_layer.1}
  #allocation0 [shape = 'u32[]', space=smem, size = 0x4, offset = 0x4, fixed_abs, tag = 'smem constant byte address 0x4 - core index']
  #allocation1 [shape = 'u32[144,128]{1,0:T(1,128)}', space=vmem, size = 0x12000, scoped, tag = 'internal scratch']
  %s0 = inlined_call_operand.vmem [shape: f32[4,512], index: 0, kind: input, shape index: {}]
  %s1 = inlined_call_operand.vmem [shape: f32[32,4], index: 1, kind: input, shape index: {}]
  %s2 = inlined_call_operand.vmem [shape: f32[32,3], index: 2, kind: input, shape index: {}]
  %s3 = inlined_call_operand.vmem [shape: f32[4,32], index: 3, kind: input, shape index: {}]
  %s4 = inlined_call_operand.vmem [shape: f32[4,3], index: 4, kind: input, shape index: {}]
  %s5 = inlined_call_operand.vmem [shape: f32[4,512], index: 5, kind: output, shape index: {}]
  %s6 = sld [smem:[#allocation0]]
  $region53: #{subgraph_layer.1} parent=0
    _
  %s8 = ssub.s32 1, %s6
  %s9 = scalar_select 0, %s8, %s6
  loop: start=0, step=1, limit=4
  $region2: #{subgraph_layer.1} parent=0 // loop_pre_header
    _
  $region3: #{subgraph_layer.1} parent=0 // loop_header
    %s11 = sphi 0, %s15
    %p12 = scmp.ge.s32.totalorder %s11, 4
    %s21 = sphi 0, %s23
    %s24 = sphi 0, %s21
    %s25 = sphi 0, %s24
    %s41 = sphi 0, %s25
    %s45 = sphi 0, %s45
    %s47 = sphi 0, %s45
    %s48 = sphi 0, %s47
    %s62 = sphi 0, %s48
    %s66 = sphi 0, %s66
    %s68 = sphi 0, %s66
    %s69 = sphi 0, %s68
    %s83 = sphi 0, %s69
    %s87 = sphi 0, %s87
    %s89 = sphi 0, %s87
    %s90 = sphi 0, %s89
    %s104 = sphi 0, %s90
    %s108 = sphi 0, %s108
    %s110 = sphi 0, %s108
    %s111 = sphi 0, %s110
    %s125 = sphi 0, %s111
    %s131 = sphi 0, %s133
    %s134 = sphi 0, %s131
    %s135 = sphi 0, %s134
    %s151 = sphi 0, %s135
  $region4: #{subgraph_layer.1} parent=0 // loop_header_branch
    %14 = sbr.rel (%p12) target = $region8
  $region5: #{subgraph_layer.1} parent=0 // loop_body
    %s16 = ssub.s32 %s11, 1
    %s17 = ssub.s32 %s11, 2
    %s18 = sadd.s32 %s11, 1
    %s19 = ssub.s32 %s11, %s18
    %p20 = scmp.eq.s32.totalorder %s19, 0
    %s22 = sadd.s32 %s21, 1
    %s23 = scalar_select %p20, %s21, %s22
    %p26 = pneg %p20
    %p27 = scmp.eq.s32.totalorder %s11, 1
    %p28 = por %p26, %p27
    %p29 = scmp.ne.s32.totalorder %s21, %s24
    %p30 = scmp.eq.s32.totalorder %s11, 0
    %p31 = por %p29, %p30
    %p32 = scmp.ne.s32.totalorder %s21, %s24
    %p33 = scmp.eq.s32.totalorder %s16, 1
    %p34 = por %p32, %p33
    %p35 = scmp.ne.s32.totalorder %s24, %s25
    %p36 = scmp.eq.s32.totalorder %s16, 0
    %p37 = por %p35, %p36
    %p38 = scmp.ne.s32.totalorder %s24, %s25
    %p39 = scmp.eq.s32.totalorder %s17, 1
    %p40 = por %p38, %p39
    %p42 = scmp.ne.s32.totalorder %s25, %s41
    %p43 = scmp.eq.s32.totalorder %s17, 0
    %p44 = por %p42, %p43
    %s46 = sadd.s32 %s45, 1
    %p49 = scmp.eq.s32.totalorder %s11, 1
    %p50 = scmp.ne.s32.totalorder %s45, %s47
    %p51 = scmp.eq.s32.totalorder %s11, 0
    %p52 = por %p50, %p51
    %p53 = scmp.ne.s32.totalorder %s45, %s47
    %p54 = scmp.eq.s32.totalorder %s16, 1
    %p55 = por %p53, %p54
    %p56 = scmp.ne.s32.totalorder %s47, %s48
    %p57 = scmp.eq.s32.totalorder %s16, 0
    %p58 = por %p56, %p57
    %p59 = scmp.ne.s32.totalorder %s47, %s48
    %p60 = scmp.eq.s32.totalorder %s17, 1
    %p61 = por %p59, %p60
    %p63 = scmp.ne.s32.totalorder %s48, %s62
    %p64 = scmp.eq.s32.totalorder %s17, 0
    %p65 = por %p63, %p64
    %s67 = sadd.s32 %s66, 1
    %p70 = scmp.eq.s32.totalorder %s11, 1
    %p71 = scmp.ne.s32.totalorder %s66, %s68
    %p72 = scmp.eq.s32.totalorder %s11, 0
    %p73 = por %p71, %p72
    %p74 = scmp.ne.s32.totalorder %s66, %s68
    %p75 = scmp.eq.s32.totalorder %s16, 1
    %p76 = por %p74, %p75
    %p77 = scmp.ne.s32.totalorder %s68, %s69
    %p78 = scmp.eq.s32.totalorder %s16, 0
    %p79 = por %p77, %p78
    %p80 = scmp.ne.s32.totalorder %s68, %s69
    %p81 = scmp.eq.s32.totalorder %s17, 1
    %p82 = por %p80, %p81
    %p84 = scmp.ne.s32.totalorder %s69, %s83
    %p85 = scmp.eq.s32.totalorder %s17, 0
    %p86 = por %p84, %p85
    %s88 = sadd.s32 %s87, 1
    %p91 = scmp.eq.s32.totalorder %s11, 1
    %p92 = scmp.ne.s32.totalorder %s87, %s89
    %p93 = scmp.eq.s32.totalorder %s11, 0
    %p94 = por %p92, %p93
    %p95 = scmp.ne.s32.totalorder %s87, %s89
    %p96 = scmp.eq.s32.totalorder %s16, 1
    %p97 = por %p95, %p96
    %p98 = scmp.ne.s32.totalorder %s89, %s90
    %p99 = scmp.eq.s32.totalorder %s16, 0
    %p100 = por %p98, %p99
    %p101 = scmp.ne.s32.totalorder %s89, %s90
    %p102 = scmp.eq.s32.totalorder %s17, 1
    %p103 = por %p101, %p102
    %p105 = scmp.ne.s32.totalorder %s90, %s104
    %p106 = scmp.eq.s32.totalorder %s17, 0
    %p107 = por %p105, %p106
    %s109 = sadd.s32 %s108, 1
    %p112 = scmp.eq.s32.totalorder %s11, 1
    %p113 = scmp.ne.s32.totalorder %s108, %s110
    %p114 = scmp.eq.s32.totalorder %s11, 0
    %p115 = por %p113, %p114
    %p116 = scmp.ne.s32.totalorder %s108, %s110
    %p117 = scmp.eq.s32.totalorder %s16, 1
    %p118 = por %p116, %p117
    %p119 = scmp.ne.s32.totalorder %s110, %s111
    %p120 = scmp.eq.s32.totalorder %s16, 0
    %p121 = por %p119, %p120
    %p122 = scmp.ne.s32.totalorder %s110, %s111
    %p123 = scmp.eq.s32.totalorder %s17, 1
    %p124 = por %p122, %p123
    %p126 = scmp.ne.s32.totalorder %s111, %s125
    %p127 = scmp.eq.s32.totalorder %s17, 0
    %p128 = por %p126, %p127
    %s129 = ssub.s32 %s11, %s18
    %p130 = scmp.eq.s32.totalorder %s129, 0
    %s132 = sadd.s32 %s131, 1
    %s133 = scalar_select %p130, %s131, %s132
    %p136 = pneg %p130
    %p137 = scmp.eq.s32.totalorder %s11, 1
    %p138 = por %p136, %p137
    %p139 = scmp.ne.s32.totalorder %s131, %s134
    %p140 = scmp.eq.s32.totalorder %s11, 0
    %p141 = por %p139, %p140
    %p142 = scmp.ne.s32.totalorder %s131, %s134
    %p143 = scmp.eq.s32.totalorder %s16, 1
    %p144 = por %p142, %p143
    %p145 = scmp.ne.s32.totalorder %s134, %s135
    %p146 = scmp.eq.s32.totalorder %s16, 0
    %p147 = por %p145, %p146
    %p148 = scmp.ne.s32.totalorder %s134, %s135
    %p149 = scmp.eq.s32.totalorder %s17, 1
    %p150 = por %p148, %p149
    %p152 = scmp.ne.s32.totalorder %s135, %s151
    %p153 = scmp.eq.s32.totalorder %s17, 0
    %p154 = por %p152, %p153
    %p155 = scmp.le.s32.totalorder 1, %s11
    %p156 = scmp.lt.s32.totalorder %s11, 3
    %p157 = pnand %p155, %p156
    %p158 = pneg %p157
    // Predicated region
    $region9: #{subgraph_layer.1} parent=5 // pred_check
      _
    $region10: #{subgraph_layer.1} parent=5 // pred_check_branch
      %160 = sbr.rel (%p157) target = $region12
    $region11: #{subgraph_layer.1} parent=5 // pred_region
      %s161 = ssub.s32 %s11, 1
      // Predicated region
      $region13: #{subgraph_layer.1} parent=11 // pred_check
        %p162 = pneg %p58
      $region14: #{subgraph_layer.1} parent=11 // pred_check_branch
        %164 = sbr.rel (%p162) target = $region16
      $region15: #{subgraph_layer.1} parent=11 // pred_region
        _
      $region16: #{subgraph_layer.1} parent=11 // pred_fallthru
        _
      // Predicated region
      $region17: #{subgraph_layer.1} parent=11 // pred_check
        %p165 = pneg %p79
      $region18: #{subgraph_layer.1} parent=11 // pred_check_branch
        %167 = sbr.rel (%p165) target = $region20
      $region19: #{subgraph_layer.1} parent=11 // pred_region
        _
      $region20: #{subgraph_layer.1} parent=11 // pred_fallthru
        _
      // Predicated region
      $region21: #{subgraph_layer.1} parent=11 // pred_check
        %p168 = pneg %p100
      $region22: #{subgraph_layer.1} parent=11 // pred_check_branch
        %170 = sbr.rel (%p168) target = $region24
      $region23: #{subgraph_layer.1} parent=11 // pred_region
        _
      $region24: #{subgraph_layer.1} parent=11 // pred_fallthru
        _
      // Predicated region
      $region25: #{subgraph_layer.1} parent=11 // pred_check
        %p171 = pneg %p121
      $region26: #{subgraph_layer.1} parent=11 // pred_check_branch
        %173 = sbr.rel (%p171) target = $region28
      $region27: #{subgraph_layer.1} parent=11 // pred_region
        _
      $region28: #{subgraph_layer.1} parent=11 // pred_fallthru
        _
    $region12: #{subgraph_layer.1} parent=5 // pred_fallthru
      _
    %p174 = scmp.lt.s32.totalorder %s11, 2
    // Predicated region
    $region29: #{subgraph_layer.1} parent=5 // pred_check
      %p175 = pneg %p174
    $region30: #{subgraph_layer.1} parent=5 // pred_check_branch
      %177 = sbr.rel (%p175) target = $region32
    $region31: #{subgraph_layer.1} parent=5 // pred_region
      // Predicated region
      $region33: #{subgraph_layer.1} parent=31 // pred_check
        %p178 = pneg %p31
      $region34: #{subgraph_layer.1} parent=31 // pred_check_branch
        %180 = sbr.rel (%p178) target = $region36
      $region35: #{subgraph_layer.1} parent=31 // pred_region
        %s181 = smul.u32 2, %s11
        %p182 = scmp.lt.s32.totalorder %s181, 3
        %s183 = scalar_select %p182, %s181, 3
        %s184 = smul.addr %s183, 4
        %s185 = scalar_lea.vmem %s0, %s184
        %s186 = smul.u32 2, %s11
      $region36: #{subgraph_layer.1} parent=31 // pred_fallthru
        _
    $region32: #{subgraph_layer.1} parent=5 // pred_fallthru
      _
    %p187 = scmp.le.s32.totalorder 1, %s11
    %p188 = scmp.lt.s32.totalorder %s11, 3
    %p189 = pnand %p187, %p188
    %p190 = pneg %p189
    // Predicated region
    $region37: #{subgraph_layer.1} parent=5 // pred_check
      _
    $region38: #{subgraph_layer.1} parent=5 // pred_check_branch
      %192 = sbr.rel (%p189) target = $region40
    $region39: #{subgraph_layer.1} parent=5 // pred_region
      %s193 = ssub.s32 %s11, 1
      %s194 = smul.u32 2, %s16
      %p195 = scmp.lt.s32.totalorder %s194, 3
      %s196 = scalar_select %p195, %s194, 3
      %s197 = smul.addr %s196, 4
      %s198 = scalar_lea.vmem %s0, %s197
      %p199 = pneg %p37
      %p200 = pneg %p34
      %p201 = pneg %p58
      %p202 = pneg %p55
      %p203 = pneg %p79
      %p204 = pneg %p76
      %p205 = pneg %p100
      %p206 = pneg %p97
      %p207 = pneg %p121
      %p208 = pneg %p118
      %p209 = pneg %p147
      %p210 = pneg %p144
      %s211 = smul.u32 2, %s16
      %p212 = scmp.lt.s32.totalorder %s211, 3
      %s213 = scalar_select %p212, %s211, 3
      %s214 = smul.addr %s213, 4
      %s215 = scalar_lea.vmem %s5, %s214
      %s216 = smul.u32 2, %s16
      %p217 = scmp.lt.s32.totalorder %s216, 3
      %s218 = scalar_select %p217, %s216, 3
      %s219 = smul.addr %s218, 4
      %s220 = scalar_lea.vmem %s0, %s219
      %s221 = smul.u32 2, %s16
      %s222 = smul.u32 2, %s16
      %p223 = scmp.lt.s32.totalorder %s222, 3
      %s224 = scalar_select %p223, %s222, 3
      %s225 = smul.addr %s224, 4
      %s226 = scalar_lea.vmem %s5, %s225
      %s227 = smul.u32 2, %s16
      %v228 = vld [vmem:[%s2] sm:$0xff]
      %v229 = vld [vmem:[%s2 + $0x8] sm:$0xff]
      %v230 = vld [vmem:[%s2 + $0x10] sm:$0xff]
      %v231 = vld [vmem:[%s2 + $0x18] sm:$0xff]
      %v232 = vld [vmem:[%s4] sm:$0xf]
      %v233 = vld [vmem:[%s1] sm:$0xff]
      %v234 = vld [vmem:[%s1 + $0x8] sm:$0xff]
      %v235 = vld [vmem:[%s1 + $0x10] sm:$0xff]
      %v236 = vld [vmem:[%s1 + $0x18] sm:$0xff]
      %v237 = vld [vmem:[%s220] sm:$0xff]
      %239 = vset.pattern.permute.xlu0 0
      %240 = vperm.xlu0 %239, %v228
      %v241 = vpop.permute.xlu0 %240
      %244 = vset.pattern.permute.xlu0 0
      %245 = vperm.xlu0 %244, %v229
      %v246 = vpop.permute.xlu0 %245
      %249 = vset.pattern.permute.xlu0 0
      %250 = vperm.xlu0 %249, %v230
      %v251 = vpop.permute.xlu0 %250
      %254 = vset.pattern.permute.xlu0 0
      %255 = vperm.xlu0 %254, %v231
      %v256 = vpop.permute.xlu0 %255
      %v259 = vcombine.high %v237, %v237
      %vm260 = vcmask 31744
      %v262 = vsel %vm260, %v233, 0
      %v265 = vsel %vm260, %v234, 0
      %v268 = vsel %vm260, %v235, 0
      %v271 = vsel %vm260, %v236, 0
      %vm273 = vcmask 1043456
      %v274 = vsel %vm273, %v237, 0
      %v276 = vsel %vm273, %v259, 0
      %278 = vmatprep.subr.mxu0 0.0
      %279 = vmatpush1.msra.mxu0 0.0
      %280 = vmatprep.subr.mxu0 0.0
      %281 = vmatpush1.msra.mxu0 0.0
      %282 = vmatprep.subr.mxu0 0.0
      %283 = vmatpush1.msra.mxu0 0.0
      %284 = vmatprep.subr.mxu0 0.0
      %285 = vmatpush1.msra.mxu0 0.0
      %286 = vmatprep.subr.mxu0 0.0
      %287 = vmatpush1.msra.mxu0 0.0
      %288 = vmatprep.subr.mxu0 0.0
      %289 = vmatpush1.msra.mxu0 0.0
      %290 = vmatprep.subr.mxu0 0.0
      %291 = vmatpush1.msra.mxu0 0.0
      %292 = vmatprep.subr.mxu0 0.0
      %293 = vmatpush1.msra.mxu0 0.0
      %294 = vmatprep.subr.mxu0 0.0
      %295 = vmatpush1.msra.mxu0 0.0
      %296 = vmatprep.subr.mxu0 0.0
      %297 = vmatpush1.msra.mxu0 0.0
      %298 = vmatprep.subr.mxu0 0.0
      %299 = vmatpush1.msra.mxu0 0.0
      %300 = vmatprep.subr.mxu0 0.0
      %301 = vmatpush1.msra.mxu0 0.0
      %302 = vmatprep.subr.mxu0 0.0
      %303 = vmatpush1.msra.mxu0 0.0
      %304 = vmatprep.subr.mxu0 0.0
      %305 = vmatpush1.msra.mxu0 0.0
      %306 = vmatprep.subr.mxu0 0.0
      %307 = vmatpush1.msra.mxu0 0.0
      %308 = vmatprep.subr.mxu0 %v276
      %309 = vmatpush1.msra.mxu0 %v274
      %310 = vmatprep.subr.mxu0 0.0
      %311 = vmatpush2.msra.mxu0 0.0
      %312 = vmatprep.subr.mxu0 0.0
      %313 = vmatpush2.msra.mxu0 0.0
      %314 = vmatprep.subr.mxu0 0.0
      %315 = vmatpush2.msra.mxu0 0.0
      %316 = vmatprep.subr.mxu0 0.0
      %317 = vmatpush2.msra.mxu0 0.0
      %318 = vmatprep.subr.mxu0 0.0
      %319 = vmatpush2.msra.mxu0 0.0
      %320 = vmatprep.subr.mxu0 0.0
      %321 = vmatpush2.msra.mxu0 0.0
      %322 = vmatprep.subr.mxu0 0.0
      %323 = vmatpush2.msra.mxu0 0.0
      %324 = vmatprep.subr.mxu0 0.0
      %325 = vmatpush2.msra.mxu0 0.0
      %326 = vmatprep.subr.mxu0 0.0
      %327 = vmatpush2.msra.mxu0 0.0
      %328 = vmatprep.subr.mxu0 0.0
      %329 = vmatpush2.msra.mxu0 0.0
      %330 = vmatprep.subr.mxu0 0.0
      %331 = vmatpush2.msra.mxu0 0.0
      %332 = vmatprep.subr.mxu0 0.0
      %333 = vmatpush2.msra.mxu0 0.0
      %334 = vmatprep.subr.mxu0 0.0
      %335 = vmatpush2.msra.mxu0 0.0
      %336 = vmatprep.subr.mxu0 0.0
      %337 = vmatpush2.msra.mxu0 0.0
      %338 = vmatprep.subr.mxu0 0.0
      %339 = vmatpush2.msra.mxu0 0.0
      %340 = vmatprep.subr.mxu0 0.0
      %341 = vmatpush2.msra.mxu0 0.0
      %342 = vmatprep.mubr.f32.mxu0 0.0
      %343 = vmatmul.mubr.f32.gmra.mxu0 %v262
      %v344 = vpop.f32.mrf.mxu0
      %v345 = vadd.f32 %v241, %v344
      %v346 = vpop.f32.mrf.mxu0
      %v347 = vadd.f32 %v241, %v346
      %348 = vmatprep.mubr.f32.mxu0 0.0
      %349 = vmatmul.mubr.f32.gmra.mxu0 %v265
      %v350 = vpop.f32.mrf.mxu0
      %v351 = vadd.f32 %v246, %v350
      %v352 = vpop.f32.mrf.mxu0
      %v353 = vadd.f32 %v246, %v352
      %354 = vmatprep.mubr.f32.mxu0 0.0
      %355 = vmatmul.mubr.f32.gmra.mxu0 %v268
      %v356 = vpop.f32.mrf.mxu0
      %v357 = vadd.f32 %v251, %v356
      %v358 = vpop.f32.mrf.mxu0
      %v359 = vadd.f32 %v251, %v358
      %360 = vmatprep.mubr.f32.mxu0 0.0
      %361 = vmatmul.mubr.f32.gmra.mxu0 %v271
      %v362 = vpop.f32.mrf.mxu0
      %v363 = vadd.f32 %v256, %v362
      %v364 = vpop.f32.mrf.mxu0
      %v365 = vadd.f32 %v256, %v364
      %366 = vdwg.mxu0
      %v367 = vadd.f32 %v345, %v351
      %v368 = vadd.f32 %v367, %v357
      %v369 = vadd.f32 %v368, %v363
      %v370 = vrot.slane %v369, 4
      %v371 = vadd.f32 %v369, %v370
      %v372 = vrot.slane %v371, 2
      %v373 = vadd.f32 %v371, %v372
      %v374 = vrot.slane %v373, 1
      %v375 = vadd.f32 %v373, %v374
      %v376 = vadd.f32 %v347, %v353
      %v377 = vadd.f32 %v376, %v359
      %v378 = vadd.f32 %v377, %v365
      %v379 = vrot.slane %v378, 4
      %v380 = vadd.f32 %v378, %v379
      %v381 = vrot.slane %v380, 2
      %v382 = vadd.f32 %v380, %v381
      %v383 = vrot.slane %v382, 1
      %v384 = vadd.f32 %v382, %v383
      %v385 = vmul.f32 %v375, 0.03125
      %v386 = vmul.f32 %v384, 0.03125
      %v387 = vsub.f32 %v345, %v385
      %v388 = vsub.f32 %v347, %v386
      %v389 = vsub.f32 %v351, %v385
      %v390 = vsub.f32 %v353, %v386
      %v391 = vsub.f32 %v357, %v385
      %v392 = vsub.f32 %v359, %v386
      %v393 = vsub.f32 %v363, %v385
      %v394 = vsub.f32 %v365, %v386
      %v395 = vmul.f32 %v387, %v387
      %v396 = vmul.f32 %v388, %v388
      %v397 = vmul.f32 %v389, %v389
      %v398 = vmul.f32 %v390, %v390
      %v399 = vmul.f32 %v391, %v391
      %v400 = vmul.f32 %v392, %v392
      %v401 = vmul.f32 %v393, %v393
      %v402 = vmul.f32 %v394, %v394
      %v403 = vadd.f32 %v395, %v397
      %v404 = vadd.f32 %v403, %v399
      %v405 = vadd.f32 %v404, %v401
      %v406 = vrot.slane %v405, 4
      %v407 = vadd.f32 %v405, %v406
      %v408 = vrot.slane %v407, 2
      %v409 = vadd.f32 %v407, %v408
      %v410 = vrot.slane %v409, 1
      %v411 = vadd.f32 %v409, %v410
      %v412 = vadd.f32 %v396, %v398
      %v413 = vadd.f32 %v412, %v400
      %v414 = vadd.f32 %v413, %v402
      %v415 = vrot.slane %v414, 4
      %v416 = vadd.f32 %v414, %v415
      %v417 = vrot.slane %v416, 2
      %v418 = vadd.f32 %v416, %v417
      %v419 = vrot.slane %v418, 1
      %v420 = vadd.f32 %v418, %v419
      %v421 = vmul.f32 %v411, 0.03125
      %v422 = vmul.f32 %v420, 0.03125
      %v423 = vadd.f32 %v421, 1e-05
      %v424 = vadd.f32 %v422, 1e-05
      %v425 = vrsqrt.pop %v423
      %v426 = vrsqrt.pop %v424
      %v427 = vmul.f32 %v387, %v425
      %v428 = vmul.f32 %v388, %v426
      %v429 = vmul.f32 %v389, %v425
      %v430 = vmul.f32 %v390, %v426
      %v431 = vmul.f32 %v391, %v425
      %v432 = vmul.f32 %v392, %v426
      %v433 = vmul.f32 %v393, %v425
      %v434 = vmul.f32 %v394, %v426
      %435 = vset.pattern.permute.xlu0 1
      %436 = vperm.xlu0 %435, %v228
      %v437 = vpop.permute.xlu0 %436
      %439 = vset.pattern.permute.xlu0 1
      %440 = vperm.xlu0 %439, %v229
      %v441 = vpop.permute.xlu0 %440
      %443 = vset.pattern.permute.xlu0 1
      %444 = vperm.xlu0 %443, %v230
      %v445 = vpop.permute.xlu0 %444
      %447 = vset.pattern.permute.xlu0 1
      %448 = vperm.xlu0 %447, %v231
      %v449 = vpop.permute.xlu0 %448
      %v451 = vmul.f32 %v427, %v437
      %v452 = vmul.f32 %v428, %v437
      %v453 = vmul.f32 %v429, %v441
      %v454 = vmul.f32 %v430, %v441
      %v455 = vmul.f32 %v431, %v445
      %v456 = vmul.f32 %v432, %v445
      %v457 = vmul.f32 %v433, %v449
      %v458 = vmul.f32 %v434, %v449
      %459 = vset.pattern.permute.xlu0 2
      %460 = vperm.xlu0 %459, %v228
      %v461 = vpop.permute.xlu0 %460
      %463 = vset.pattern.permute.xlu0 2
      %464 = vperm.xlu0 %463, %v229
      %v465 = vpop.permute.xlu0 %464
      %467 = vset.pattern.permute.xlu0 2
      %468 = vperm.xlu0 %467, %v230
      %v469 = vpop.permute.xlu0 %468
      %471 = vset.pattern.permute.xlu0 2
      %472 = vperm.xlu0 %471, %v231
      %v473 = vpop.permute.xlu0 %472
      %v475 = vadd.f32 %v451, %v461
      %v476 = vadd.f32 %v452, %v461
      %v477 = vadd.f32 %v453, %v465
      %v478 = vadd.f32 %v454, %v465
      %v479 = vadd.f32 %v455, %v469
      %v480 = vadd.f32 %v456, %v469
      %v481 = vadd.f32 %v457, %v473
      %v482 = vadd.f32 %v458, %v473
      %v483 = vmax.f32 %v475, 0.0
      %v484 = vmax.f32 %v476, 0.0
      %v485 = vmax.f32 %v477, 0.0
      %v486 = vmax.f32 %v478, 0.0
      %v487 = vmax.f32 %v479, 0.0
      %v488 = vmax.f32 %v480, 0.0
      %v489 = vmax.f32 %v481, 0.0
      %v490 = vmax.f32 %v482, 0.0
      %v491 = vld [vmem:[%s3] sm:$0xf]
      %493 = vset.pattern.permute.xlu0 0
      %494 = vperm.xlu0 %493, %v232
      %v495 = vpop.permute.xlu0 %494
      %vm497 = vcmask 261120
      %v499 = vsel %vm497, %v491, 0
      %501 = vmatprep.subr.mxu0 0.0
      %502 = vmatpush1.msra.mxu0 0.0
      %503 = vmatprep.subr.mxu0 0.0
      %504 = vmatpush1.msra.mxu0 0.0
      %505 = vmatprep.subr.mxu0 0.0
      %506 = vmatpush1.msra.mxu0 0.0
      %507 = vmatprep.subr.mxu0 0.0
      %508 = vmatpush1.msra.mxu0 0.0
      %509 = vmatprep.subr.mxu0 0.0
      %510 = vmatpush1.msra.mxu0 0.0
      %511 = vmatprep.subr.mxu0 0.0
      %512 = vmatpush1.msra.mxu0 0.0
      %513 = vmatprep.subr.mxu0 0.0
      %514 = vmatpush1.msra.mxu0 0.0
      %515 = vmatprep.subr.mxu0 0.0
      %516 = vmatpush1.msra.mxu0 0.0
      %517 = vmatprep.subr.mxu0 0.0
      %518 = vmatpush1.msra.mxu0 0.0
      %519 = vmatprep.subr.mxu0 0.0
      %520 = vmatpush1.msra.mxu0 0.0
      %521 = vmatprep.subr.mxu0 0.0
      %522 = vmatpush1.msra.mxu0 0.0
      %523 = vmatprep.subr.mxu0 0.0
      %524 = vmatpush1.msra.mxu0 0.0
      %525 = vmatprep.subr.mxu0 %v490
      %526 = vmatpush1.msra.mxu0 %v489
      %527 = vmatprep.subr.mxu0 %v488
      %528 = vmatpush1.msra.mxu0 %v487
      %529 = vmatprep.subr.mxu0 %v486
      %530 = vmatpush1.msra.mxu0 %v485
      %531 = vmatprep.subr.mxu0 %v484
      %532 = vmatpush1.msra.mxu0 %v483
      %533 = vmatprep.subr.mxu0 0.0
      %534 = vmatpush2.msra.mxu0 0.0
      %535 = vmatprep.subr.mxu0 0.0
      %536 = vmatpush2.msra.mxu0 0.0
      %537 = vmatprep.subr.mxu0 0.0
      %538 = vmatpush2.msra.mxu0 0.0
      %539 = vmatprep.subr.mxu0 0.0
      %540 = vmatpush2.msra.mxu0 0.0
      %541 = vmatprep.subr.mxu0 0.0
      %542 = vmatpush2.msra.mxu0 0.0
      %543 = vmatprep.subr.mxu0 0.0
      %544 = vmatpush2.msra.mxu0 0.0
      %545 = vmatprep.subr.mxu0 0.0
      %546 = vmatpush2.msra.mxu0 0.0
      %547 = vmatprep.subr.mxu0 0.0
      %548 = vmatpush2.msra.mxu0 0.0
      %549 = vmatprep.subr.mxu0 0.0
      %550 = vmatpush2.msra.mxu0 0.0
      %551 = vmatprep.subr.mxu0 0.0
      %552 = vmatpush2.msra.mxu0 0.0
      %553 = vmatprep.subr.mxu0 0.0
      %554 = vmatpush2.msra.mxu0 0.0
      %555 = vmatprep.subr.mxu0 0.0
      %556 = vmatpush2.msra.mxu0 0.0
      %557 = vmatprep.subr.mxu0 0.0
      %558 = vmatpush2.msra.mxu0 0.0
      %559 = vmatprep.subr.mxu0 0.0
      %560 = vmatpush2.msra.mxu0 0.0
      %561 = vmatprep.subr.mxu0 0.0
      %562 = vmatpush2.msra.mxu0 0.0
      %563 = vmatprep.subr.mxu0 0.0
      %564 = vmatpush2.msra.mxu0 0.0
      %565 = vmatprep.mubr.f32.mxu0 0.0
      %566 = vmatmul.mubr.f32.gmra.mxu0 %v499
      %v567 = vpop.f32.mrf.mxu0
      %v568 = vadd.f32 %v495, %v567
      %v569 = vpop.f32.mrf.mxu0
      %v570 = vadd.f32 %v495, %v569
      %571 = vdwg.mxu0
      %v572 = vsel %vm273, %v568, 0.0
      %v573 = vrot.slane %v572, 4
      %v574 = vadd.f32 %v572, %v573
      %v575 = vrot.slane %v574, 2
      %v576 = vadd.f32 %v574, %v575
      %v577 = vrot.slane %v576, 1
      %v578 = vadd.f32 %v576, %v577
      %v579 = vsel %vm273, %v570, 0.0
      %v580 = vrot.slane %v579, 4
      %v581 = vadd.f32 %v579, %v580
      %v582 = vrot.slane %v581, 2
      %v583 = vadd.f32 %v581, %v582
      %v584 = vrot.slane %v583, 1
      %v585 = vadd.f32 %v583, %v584
      %v586 = vmul.f32 %v578, 0.25
      %v587 = vmul.f32 %v585, 0.25
      %v588 = vsub.f32 %v568, %v586
      %v589 = vsub.f32 %v570, %v587
      %v590 = vmul.f32 %v588, %v588
      %v591 = vmul.f32 %v589, %v589
      %v592 = vsel %vm273, %v590, 0.0
      %v593 = vrot.slane %v592, 4
      %v594 = vadd.f32 %v592, %v593
      %v595 = vrot.slane %v594, 2
      %v596 = vadd.f32 %v594, %v595
      %v597 = vrot.slane %v596, 1
      %v598 = vadd.f32 %v596, %v597
      %v599 = vsel %vm273, %v591, 0.0
      %v600 = vrot.slane %v599, 4
      %v601 = vadd.f32 %v599, %v600
      %v602 = vrot.slane %v601, 2
      %v603 = vadd.f32 %v601, %v602
      %v604 = vrot.slane %v603, 1
      %v605 = vadd.f32 %v603, %v604
      %v606 = vmul.f32 %v598, 0.25
      %v607 = vmul.f32 %v605, 0.25
      %v608 = vadd.f32 %v606, 1e-05
      %v609 = vadd.f32 %v607, 1e-05
      %v610 = vrsqrt.pop %v608
      %v611 = vrsqrt.pop %v609
      %v612 = vmul.f32 %v588, %v610
      %v613 = vmul.f32 %v589, %v611
      %614 = vset.pattern.permute.xlu0 1
      %615 = vperm.xlu0 %614, %v232
      %v616 = vpop.permute.xlu0 %615
      %v618 = vmul.f32 %v612, %v616
      %v619 = vmul.f32 %v613, %v616
      %620 = vset.pattern.permute.xlu0 2
      %621 = vperm.xlu0 %620, %v232
      %v622 = vpop.permute.xlu0 %621
      %v624 = vadd.f32 %v618, %v622
      %v625 = vadd.f32 %v619, %v622
      %v626 = vmax.f32 %v624, 0.0
      %v627 = vmax.f32 %v625, 0.0
      %v630 = vcombine.low %v626, %v627
      %632 = vst [vmem:[%s226] sm:$0xff] %v630
      %s633 = smul.u32 2, %s16
      %p634 = scmp.lt.s32.totalorder %s633, 3
      %s635 = scalar_select %p634, %s633, 3
      %s636 = smul.addr %s635, 4
      %s637 = scalar_lea.vmem %s5, %s636
      // Predicated region
      $region41: #{subgraph_layer.1} parent=39 // pred_check
        %p638 = pneg %p144
      $region42: #{subgraph_layer.1} parent=39 // pred_check_branch
        %640 = sbr.rel (%p638) target = $region44
      $region43: #{subgraph_layer.1} parent=39 // pred_region
        %s641 = smul.u32 2, %s16
      $region44: #{subgraph_layer.1} parent=39 // pred_fallthru
        _
    $region40: #{subgraph_layer.1} parent=5 // pred_fallthru
      _
    %p642 = scmp.le.s32.totalorder 2, %s11
    // Predicated region
    $region45: #{subgraph_layer.1} parent=5 // pred_check
      %p643 = pneg %p642
    $region46: #{subgraph_layer.1} parent=5 // pred_check_branch
      %645 = sbr.rel (%p643) target = $region48
    $region47: #{subgraph_layer.1} parent=5 // pred_region
      %s646 = ssub.s32 %s11, 2
      // Predicated region
      $region49: #{subgraph_layer.1} parent=47 // pred_check
        %p647 = pneg %p150
      $region50: #{subgraph_layer.1} parent=47 // pred_check_branch
        %649 = sbr.rel (%p647) target = $region52
      $region51: #{subgraph_layer.1} parent=47 // pred_region
        %s650 = smul.u32 2, %s17
        %p651 = scmp.lt.s32.totalorder %s650, 3
        %s652 = scalar_select %p651, %s650, 3
        %s653 = smul.addr %s652, 4
        %s654 = scalar_lea.vmem %s5, %s653
      $region52: #{subgraph_layer.1} parent=47 // pred_fallthru
        _
    $region48: #{subgraph_layer.1} parent=5 // pred_fallthru
      _
  $region6: #{subgraph_layer.1} parent=0 // loop_footer
    %s15 = sadd.s32 1, %s11
  $region7: #{subgraph_layer.1} parent=0 // loop_footer_branch
    %10 = sbr.rel target = $region3
  $region8: #{subgraph_layer.1} parent=0 // loop_exit
    _

</llo_original>
